<compile_context>
chip_gen: v7x
topology: tpu7x:2x2x1
jax: 0.10.0
libtpu: 0.0.40
codegen_flags: <defaults>
</compile_context>

<pallas_src>
import functools

import jax
import jax.numpy as jnp
from jax.experimental import pallas as pl
from jax.experimental.pallas import tpu as pltpu


def conv_stats_kernel(x_ref, w_ref, y_ref, stat_ref):
    """Fused-K conv matmul + BN partial statistics for one row tile.

    x_ref:    (tm, K)      bf16  im2col rows (taps, then a constant-1 column)
    w_ref:    (K, Cpad)    bf16  weight slab (conv bias in the last row)
    y_ref:    (tm, Cpad)   bf16  conv output tile (lane-dense)
    stat_ref: (1, 2, Cpad) f32   per-tile [sum, sum-of-squares]
    """
    acc = jnp.dot(x_ref[...], w_ref[...], preferred_element_type=jnp.float32)
    y_ref[...] = acc.astype(y_ref.dtype)
    # Single 2-row store of the BN partial statistics (reduced in glue).
    stat_ref[0] = jnp.concatenate(
        [jnp.sum(acc, axis=0, keepdims=True),
         jnp.sum(acc * acc, axis=0, keepdims=True)], axis=0)


def conv_bn_relu(x, w, b, gamma, beta, *, stride=1, padding=0, eps=1e-5,
                 tm=128):
    """Conv2d (+bias) -> BatchNorm2d (train-mode batch stats) -> ReLU."""
    N, Cin, H, W = x.shape
    Cout, _, KH, KW = w.shape
    Hout = (H + 2 * padding - KH) // stride + 1
    Wout = (W + 2 * padding - KW) // stride + 1
    M = N * Hout * Wout
    K = KH * KW * Cin + 1                       # +1 column carries the conv bias
    Cpad = ((Cout + 127) // 128) * 128          # lane-dense output channels
    Mpad = ((M + tm - 1) // tm) * tm
    G = Mpad // tm

    # ---- glue: lane-dense (Mpad, K) bf16 im2col slab ------------------------
    xp = jnp.pad(x.transpose(0, 2, 3, 1),
                 ((0, 0), (padding, padding), (padding, padding), (0, 0)))
    xp = xp.astype(jnp.bfloat16)
    taps = []
    for kh in range(KH):
        for kw in range(KW):
            taps.append(xp[:, kh:kh + (Hout - 1) * stride + 1:stride,
                              kw:kw + (Wout - 1) * stride + 1:stride, :])
    x2 = jnp.concatenate(taps, axis=-1).reshape(M, KH * KW * Cin)
    x2 = jnp.concatenate([x2, jnp.ones((M, 1), jnp.bfloat16)], axis=-1)
    # Zero-pad rows to a multiple of tm (zero rows contribute 0 to sum/sumsq).
    x2 = jnp.pad(x2, ((0, Mpad - M), (0, 0)))

    # ---- glue: (K, Cpad) bf16 weight slab, bias as the last row --------------
    wmat = jnp.concatenate(
        [w.transpose(2, 3, 1, 0).reshape(KH * KW * Cin, Cout),
         b.reshape(1, Cout)], axis=0)
    w2 = jnp.zeros((K, Cpad), jnp.bfloat16).at[:, :Cout].set(
        wmat.astype(jnp.bfloat16))

    # ---- pass 1: fused conv matmul + per-tile BN partial stats ---------------
    y, stats = pl.pallas_call(
        conv_stats_kernel,
        out_shape=(jax.ShapeDtypeStruct((Mpad, Cpad), jnp.bfloat16),
                   jax.ShapeDtypeStruct((G, 2, Cpad), jnp.float32)),
        grid_spec=pltpu.PrefetchScalarGridSpec(
            num_scalar_prefetch=0,
            grid=(G,),
            in_specs=[pl.BlockSpec((tm, K), lambda m: (m, 0)),
                      pl.BlockSpec((K, Cpad), lambda m: (0, 0))],
            out_specs=[pl.BlockSpec((tm, Cpad), lambda m: (m, 0)),
                       pl.BlockSpec((1, 2, Cpad), lambda m: (m, 0, 0))]),
        compiler_params=pltpu.CompilerParams(
            dimension_semantics=("parallel",)),
    )(x2, w2)

    # ---- glue: tiny stat reduction + BN fold + ReLU + layout restore ---------
    # (elementwise epilogue intentionally lives in XLA so it fuses with the
    #  channel slice / reshape / NHWC->NCHW transpose — per perf review)
    tot = jnp.sum(stats, axis=0)                          # (2, Cpad), f32
    mean = tot[0, :Cout] / M
    var = jnp.maximum(tot[1, :Cout] / M - mean * mean, 0.0)   # biased (BN norm)
    scale = gamma.astype(jnp.float32) * jax.lax.rsqrt(var + eps)
    shift = beta.astype(jnp.float32) - mean * scale
    out = jnp.maximum(y[:M, :Cout].astype(jnp.float32) * scale + shift, 0.0)
    return out.reshape(N, Hout, Wout, Cout).transpose(0, 3, 1, 2)


def reference(x, w, b, gamma, beta, *, stride, padding, eps=1e-5):
    y = jax.lax.conv_general_dilated(
        x, w, window_strides=(stride, stride),
        padding=[(padding, padding), (padding, padding)],
        dimension_numbers=("NCHW", "OIHW", "NCHW"))
    y = y + b.reshape(1, -1, 1, 1)
    mean = y.mean(axis=(0, 2, 3), keepdims=True)
    var = y.var(axis=(0, 2, 3), keepdims=True)   # biased, matches BN normalization
    y = (y - mean) * jax.lax.rsqrt(var + eps)
    y = y * gamma.reshape(1, -1, 1, 1) + beta.reshape(1, -1, 1, 1)
    return jnp.maximum(y, 0.0)


if __name__ == "__main__":
    # Module config: Conv(in_channels=4, out_channels=8, kernel_size=3,
    #                     stride=1, padding=1, bn=True, relu=True)
    N, Cin, H, W = 2, 4, 16, 16
    Cout, KS, STRIDE, PAD = 8, 3, 1, 1

    key = jax.random.PRNGKey(0)
    kx, kw_, kb, kg, kbeta = jax.random.split(key, 5)
    x = jax.random.normal(kx, (N, Cin, H, W), jnp.float32)
    w = jax.random.normal(kw_, (Cout, Cin, KS, KS), jnp.float32) * 0.1
    b = jax.random.normal(kb, (Cout,), jnp.float32) * 0.1
    gamma = 1.0 + 0.1 * jax.random.normal(kg, (Cout,), jnp.float32)
    beta = 0.1 * jax.random.normal(kbeta, (Cout,), jnp.float32)

    fn = jax.jit(functools.partial(conv_bn_relu, stride=STRIDE, padding=PAD))
    out = jax.block_until_ready(fn(x, w, b, gamma, beta))

    # The kernel intentionally feeds the MXU bf16 operands; mirror that
    # quantization in the reference inputs so the comparison isolates kernel
    # correctness from that choice.  The remaining error budget is the bf16
    # storage of the channel-padded conv intermediate (per perf review):
    #   |dy| <= 2^-9 * max|y| (~2e-3 * 2.3), amplified by rsqrt(var+eps)*gamma
    #   (~1.7 * 1.3)  ->  ~1e-2 worst case, so assert at 2e-2.
    x_q = x.astype(jnp.bfloat16).astype(jnp.float32)
    w_q = w.astype(jnp.bfloat16).astype(jnp.float32)
    b_q = b.astype(jnp.bfloat16).astype(jnp.float32)
    ref = reference(x_q, w_q, b_q, gamma, beta, stride=STRIDE, padding=PAD)

    assert out.shape == ref.shape == (N, Cout, H, W), (out.shape, ref.shape)
    err = float(jnp.max(jnp.abs(out - ref)))
    assert err < 2e-2, err
    print("KERNEL_OK")
</pallas_src>

<mosaic_0001>
module attributes {stable_mosaic.version = 11 : i64} {
  func.func @conv_stats_kernel(%arg0: i32, %arg1: memref<128x37xbf16, #tpu.memory_space<vmem>>, %arg2: memref<37x128xbf16, #tpu.memory_space<vmem>>, %arg3: memref<128x128xbf16, #tpu.memory_space<vmem>>, %arg4: memref<1x2x128xf32, #tpu.memory_space<vmem>>) attributes {dimension_semantics = [#tpu.dimension_semantics<parallel>], iteration_bounds = array<i64: 4>, scalar_prefetch = 0 : i64, scratch_operands = 0 : i64, tpu.core_type = #tpu.core_type<tc>, window_params = [{transform_indices = @transform_0, window_bounds = array<i64: 128, 37>}, {pipeline_mode = #tpu.pipeline_mode<synchronous>, transform_indices = @transform_1, window_bounds = array<i64: 37, 128>}, {transform_indices = @transform_2, window_bounds = array<i64: 128, 128>}, {transform_indices = @transform_3, window_bounds = array<i64: 1, 2, 128>}]} {
    %c0 = arith.constant 0 : index
    %c0_0 = arith.constant 0 : index
    %0 = vector.load %arg1[%c0, %c0_0] : memref<128x37xbf16, #tpu.memory_space<vmem>>, vector<128x37xbf16>
    %c0_1 = arith.constant 0 : index
    %c0_2 = arith.constant 0 : index
    %1 = vector.load %arg2[%c0_1, %c0_2] : memref<37x128xbf16, #tpu.memory_space<vmem>>, vector<37x128xbf16>
    %cst = arith.constant dense<0.000000e+00> : vector<128x128xf32>
    %2 = tpu.matmul %0, %1, %cst {dimension_numbers = #tpu.dot_dimension_numbers<[1], [0], [0], [1], [0, 0, 1, 1], [], []>} : vector<128x37xbf16>, vector<37x128xbf16>, vector<128x128xf32> -> vector<128x128xf32>
    %3 = arith.truncf %2 : vector<128x128xf32> to vector<128x128xbf16>
    %c0_3 = arith.constant 0 : index
    %c0_4 = arith.constant 0 : index
    %4 = vector.load %arg3[%c0_3, %c0_4] : memref<128x128xbf16, #tpu.memory_space<vmem>>, vector<128x128xbf16>
    tpu.vector_store %arg3[%c0_3, %c0_4], %3 {strides = array<i32>} : memref<128x128xbf16, #tpu.memory_space<vmem>>, vector<128x128xbf16>,
    %cst_5 = arith.constant dense<0.000000e+00> : vector<128xf32>
    %5 = vector.multi_reduction <add>, %2, %cst_5 [0] : vector<128x128xf32> to vector<128xf32>
    %6 = vector.shape_cast %5 : vector<128xf32> to vector<1x128xf32>
    %7 = arith.mulf %2, %2 : vector<128x128xf32>
    %cst_6 = arith.constant dense<0.000000e+00> : vector<128xf32>
    %8 = vector.multi_reduction <add>, %7, %cst_6 [0] : vector<128x128xf32> to vector<128xf32>
    %9 = vector.shape_cast %8 : vector<128xf32> to vector<1x128xf32>
    %10 = tpu.concatenate %6, %9 in 0 : vector<1x128xf32>, vector<1x128xf32> -> vector<2x128xf32>
    %c0_7 = arith.constant 0 : index
    %c0_8 = arith.constant 0 : index
    %c0_9 = arith.constant 0 : index
    %11 = vector.load %arg4[%c0_7, %c0_8, %c0_9] : memref<1x2x128xf32, #tpu.memory_space<vmem>>, vector<1x2x128xf32>
    %12 = vector.shape_cast %11 : vector<1x2x128xf32> to vector<2x128xf32>
    %13 = vector.shape_cast %10 : vector<2x128xf32> to vector<1x2x128xf32>
    tpu.vector_store %arg4[%c0_7, %c0_8, %c0_9], %13 {strides = array<i32>} : memref<1x2x128xf32, #tpu.memory_space<vmem>>, vector<1x2x128xf32>,
    return
  }
  func.func @transform_0(%arg0: i32) -> (i32, i32) {
    %c0_i32 = arith.constant 0 : i32
    %c0_i32_0 = arith.constant 0 : i32
    return %arg0, %c0_i32 : i32, i32
  }
  func.func @transform_1(%arg0: i32) -> (i32, i32) {
    %c0_i32 = arith.constant 0 : i32
    %c0_i32_0 = arith.constant 0 : i32
    %c0_i32_1 = arith.constant 0 : i32
    return %c0_i32, %c0_i32_0 : i32, i32
  }
  func.func @transform_2(%arg0: i32) -> (i32, i32) {
    %c0_i32 = arith.constant 0 : i32
    %c0_i32_0 = arith.constant 0 : i32
    return %arg0, %c0_i32 : i32, i32
  }
  func.func @transform_3(%arg0: i32) -> (i32, i32, i32) {
    %c0_i32 = arith.constant 0 : i32
    %c0_i32_0 = arith.constant 0 : i32
    %c0_i32_1 = arith.constant 0 : i32
    return %arg0, %c0_i32, %c0_i32_0 : i32, i32, i32
  }
}

</mosaic_0001>

<llo_original>
// kernel: conv_bn_relu.1
$region0: #{conv_bn_relu.1}
  #allocation0 [shape = 'u32[]', space=smem, size = 0x4, offset = 0x4, fixed_abs, tag = 'smem constant byte address 0x4 - core index']
  #allocation1 [shape = 'u32[144,128]{1,0:T(1,128)}', space=vmem, size = 0x12000, scoped, tag = 'internal scratch']
  %s0 = inlined_call_operand.vmem [shape: bf16[512,37], index: 0, kind: input, shape index: {}]
  %s1 = inlined_call_operand.vmem [shape: bf16[37,128], index: 1, kind: input, shape index: {}]
  %s2 = inlined_call_operand.vmem [shape: bf16[512,128], index: 2, kind: output, shape index: {0}]
  %s3 = inlined_call_operand.vmem [shape: f32[4,2,128], index: 3, kind: output, shape index: {1}]
  %4 = xla_tuple %s2, %s3
  %s5 = sld [smem:[#allocation0]]
  $region49: #{conv_bn_relu.1} parent=0
    _
  %s7 = ssub.s32 1, %s5
  %s8 = scalar_select 0, %s7, %s5
  loop: start=0, step=1, limit=6
  $region2: #{conv_bn_relu.1} parent=0 // loop_pre_header
    _
  $region3: #{conv_bn_relu.1} parent=0 // loop_header
    %s10 = sphi 0, %s14
    %p11 = scmp.ge.s32.totalorder %s10, 6
    %s20 = sphi 0, %s22
    %s23 = sphi 0, %s20
    %s24 = sphi 0, %s23
    %s40 = sphi 0, %s24
    %s44 = sphi 0, %s44
    %s46 = sphi 0, %s44
    %s47 = sphi 0, %s46
    %s61 = sphi 0, %s47
    %s67 = sphi 0, %s69
    %s70 = sphi 0, %s67
    %s71 = sphi 0, %s70
    %s87 = sphi 0, %s71
    %s93 = sphi 0, %s95
    %s96 = sphi 0, %s93
    %s97 = sphi 0, %s96
    %s113 = sphi 0, %s97
  $region4: #{conv_bn_relu.1} parent=0 // loop_header_branch
    %13 = sbr.rel (%p11) target = $region8
  $region5: #{conv_bn_relu.1} parent=0 // loop_body
    %s15 = ssub.s32 %s10, 1
    %s16 = ssub.s32 %s10, 2
    %s17 = sadd.s32 %s10, 1
    %s18 = ssub.s32 %s10, %s17
    %p19 = scmp.eq.s32.totalorder %s18, 0
    %s21 = sadd.s32 %s20, 1
    %s22 = scalar_select %p19, %s20, %s21
    %p25 = pneg %p19
    %p26 = scmp.eq.s32.totalorder %s10, 3
    %p27 = por %p25, %p26
    %p28 = scmp.ne.s32.totalorder %s20, %s23
    %p29 = scmp.eq.s32.totalorder %s10, 0
    %p30 = por %p28, %p29
    %p31 = scmp.ne.s32.totalorder %s20, %s23
    %p32 = scmp.eq.s32.totalorder %s15, 3
    %p33 = por %p31, %p32
    %p34 = scmp.ne.s32.totalorder %s23, %s24
    %p35 = scmp.eq.s32.totalorder %s15, 0
    %p36 = por %p34, %p35
    %p37 = scmp.ne.s32.totalorder %s23, %s24
    %p38 = scmp.eq.s32.totalorder %s16, 3
    %p39 = por %p37, %p38
    %p41 = scmp.ne.s32.totalorder %s24, %s40
    %p42 = scmp.eq.s32.totalorder %s16, 0
    %p43 = por %p41, %p42
    %s45 = sadd.s32 %s44, 1
    %p48 = scmp.eq.s32.totalorder %s10, 3
    %p49 = scmp.ne.s32.totalorder %s44, %s46
    %p50 = scmp.eq.s32.totalorder %s10, 0
    %p51 = por %p49, %p50
    %p52 = scmp.ne.s32.totalorder %s44, %s46
    %p53 = scmp.eq.s32.totalorder %s15, 3
    %p54 = por %p52, %p53
    %p55 = scmp.ne.s32.totalorder %s46, %s47
    %p56 = scmp.eq.s32.totalorder %s15, 0
    %p57 = por %p55, %p56
    %p58 = scmp.ne.s32.totalorder %s46, %s47
    %p59 = scmp.eq.s32.totalorder %s16, 3
    %p60 = por %p58, %p59
    %p62 = scmp.ne.s32.totalorder %s47, %s61
    %p63 = scmp.eq.s32.totalorder %s16, 0
    %p64 = por %p62, %p63
    %s65 = ssub.s32 %s10, %s17
    %p66 = scmp.eq.s32.totalorder %s65, 0
    %s68 = sadd.s32 %s67, 1
    %s69 = scalar_select %p66, %s67, %s68
    %p72 = pneg %p66
    %p73 = scmp.eq.s32.totalorder %s10, 3
    %p74 = por %p72, %p73
    %p75 = scmp.ne.s32.totalorder %s67, %s70
    %p76 = scmp.eq.s32.totalorder %s10, 0
    %p77 = por %p75, %p76
    %p78 = scmp.ne.s32.totalorder %s67, %s70
    %p79 = scmp.eq.s32.totalorder %s15, 3
    %p80 = por %p78, %p79
    %p81 = scmp.ne.s32.totalorder %s70, %s71
    %p82 = scmp.eq.s32.totalorder %s15, 0
    %p83 = por %p81, %p82
    %p84 = scmp.ne.s32.totalorder %s70, %s71
    %p85 = scmp.eq.s32.totalorder %s16, 3
    %p86 = por %p84, %p85
    %p88 = scmp.ne.s32.totalorder %s71, %s87
    %p89 = scmp.eq.s32.totalorder %s16, 0
    %p90 = por %p88, %p89
    %s91 = ssub.s32 %s10, %s17
    %p92 = scmp.eq.s32.totalorder %s91, 0
    %s94 = sadd.s32 %s93, 1
    %s95 = scalar_select %p92, %s93, %s94
    %p98 = pneg %p92
    %p99 = scmp.eq.s32.totalorder %s10, 3
    %p100 = por %p98, %p99
    %p101 = scmp.ne.s32.totalorder %s93, %s96
    %p102 = scmp.eq.s32.totalorder %s10, 0
    %p103 = por %p101, %p102
    %p104 = scmp.ne.s32.totalorder %s93, %s96
    %p105 = scmp.eq.s32.totalorder %s15, 3
    %p106 = por %p104, %p105
    %p107 = scmp.ne.s32.totalorder %s96, %s97
    %p108 = scmp.eq.s32.totalorder %s15, 0
    %p109 = por %p107, %p108
    %p110 = scmp.ne.s32.totalorder %s96, %s97
    %p111 = scmp.eq.s32.totalorder %s16, 3
    %p112 = por %p110, %p111
    %p114 = scmp.ne.s32.totalorder %s97, %s113
    %p115 = scmp.eq.s32.totalorder %s16, 0
    %p116 = por %p114, %p115
    %p117 = scmp.le.s32.totalorder 1, %s10
    %p118 = scmp.lt.s32.totalorder %s10, 5
    %p119 = pnand %p117, %p118
    %p120 = pneg %p119
    // Predicated region
    $region9: #{conv_bn_relu.1} parent=5 // pred_check
      _
    $region10: #{conv_bn_relu.1} parent=5 // pred_check_branch
      %122 = sbr.rel (%p119) target = $region12
    $region11: #{conv_bn_relu.1} parent=5 // pred_region
      %s123 = ssub.s32 %s10, 1
      // Predicated region
      $region13: #{conv_bn_relu.1} parent=11 // pred_check
        %p124 = pneg %p57
      $region14: #{conv_bn_relu.1} parent=11 // pred_check_branch
        %126 = sbr.rel (%p124) target = $region16
      $region15: #{conv_bn_relu.1} parent=11 // pred_region
        _
      $region16: #{conv_bn_relu.1} parent=11 // pred_fallthru
        _
    $region12: #{conv_bn_relu.1} parent=5 // pred_fallthru
      _
    %p127 = scmp.lt.s32.totalorder %s10, 4
    // Predicated region
    $region17: #{conv_bn_relu.1} parent=5 // pred_check
      %p128 = pneg %p127
    $region18: #{conv_bn_relu.1} parent=5 // pred_check_branch
      %130 = sbr.rel (%p128) target = $region20
    $region19: #{conv_bn_relu.1} parent=5 // pred_region
      // Predicated region
      $region21: #{conv_bn_relu.1} parent=19 // pred_check
        %p131 = pneg %p30
      $region22: #{conv_bn_relu.1} parent=19 // pred_check_branch
        %133 = sbr.rel (%p131) target = $region24
      $region23: #{conv_bn_relu.1} parent=19 // pred_region
        %s134 = smul.u32 16, %s10
        %p135 = scmp.lt.s32.totalorder %s134, 63
        %s136 = scalar_select %p135, %s134, 63
        %s137 = smul.addr %s136, 4
        %s138 = scalar_lea.vmem %s0, %s137
        %s139 = smul.u32 16, %s10
      $region24: #{conv_bn_relu.1} parent=19 // pred_fallthru
        _
    $region20: #{conv_bn_relu.1} parent=5 // pred_fallthru
      _
    %p140 = scmp.le.s32.totalorder 1, %s10
    %p141 = scmp.lt.s32.totalorder %s10, 5
    %p142 = pnand %p140, %p141
    %p143 = pneg %p142
    // Predicated region
    $region25: #{conv_bn_relu.1} parent=5 // pred_check
      _
    $region26: #{conv_bn_relu.1} parent=5 // pred_check_branch
      %145 = sbr.rel (%p142) target = $region28
    $region27: #{conv_bn_relu.1} parent=5 // pred_region
      %s146 = ssub.s32 %s10, 1
      %s147 = smul.u32 16, %s15
      %p148 = scmp.lt.s32.totalorder %s147, 63
      %s149 = scalar_select %p148, %s147, 63
      %s150 = smul.addr %s149, 4
      %s151 = scalar_lea.vmem %s0, %s150
      %p152 = pneg %p36
      %p153 = pneg %p33
      %p154 = pneg %p57
      %p155 = pneg %p54
      %p156 = pneg %p83
      %p157 = pneg %p80
      %s158 = smul.u32 16, %s15
      %p159 = scmp.lt.s32.totalorder %s158, 63
      %s160 = scalar_select %p159, %s158, 63
      %s161 = smul.addr %s160, 4
      %s162 = scalar_lea.vmem %s2, %s161
      %p163 = pneg %p109
      %p164 = pneg %p106
      %p165 = scmp.lt.s32.totalorder %s15, 3
      %s166 = scalar_select %p165, %s15, 3
      %s167 = smul.addr %s166, 2
      %s168 = scalar_lea.vmem %s3, %s167
      %s169 = smul.u32 16, %s15
      %p170 = scmp.lt.s32.totalorder %s169, 63
      %s171 = scalar_select %p170, %s169, 63
      %s172 = smul.addr %s171, 4
      %s173 = scalar_lea.vmem %s0, %s172
      %s174 = smul.u32 16, %s15
      %s175 = smul.u32 16, %s15
      %p176 = scmp.lt.s32.totalorder %s175, 63
      %s177 = scalar_select %p176, %s175, 63
      %s178 = smul.addr %s177, 4
      %s179 = scalar_lea.vmem %s2, %s178
      %s180 = smul.u32 16, %s15
      %p181 = scmp.lt.s32.totalorder %s15, 3
      %s182 = scalar_select %p181, %s15, 3
      %s183 = smul.addr %s182, 2
      %s184 = scalar_lea.vmem %s3, %s183
      %v186 = vld [vmem:[%s173] sm:$0xf]
      %v187 = vld [vmem:[%s173 + $0x4] sm:$0xf]
      %v188 = vld [vmem:[%s173 + $0x8] sm:$0xf]
      %v189 = vld [vmem:[%s173 + $0xc] sm:$0xf]
      %v190 = vld [vmem:[%s173 + $0x10] sm:$0xf]
      %v191 = vld [vmem:[%s173 + $0x14] sm:$0xf]
      %v192 = vld [vmem:[%s173 + $0x18] sm:$0xf]
      %v193 = vld [vmem:[%s173 + $0x1c] sm:$0xf]
      %v194 = vld [vmem:[%s173 + $0x20] sm:$0xf]
      %v195 = vld [vmem:[%s173 + $0x24] sm:$0xf]
      %v196 = vld [vmem:[%s173 + $0x28] sm:$0xf]
      %v197 = vld [vmem:[%s173 + $0x2c] sm:$0xf]
      %v198 = vld [vmem:[%s173 + $0x30] sm:$0xf]
      %v199 = vld [vmem:[%s173 + $0x34] sm:$0xf]
      %v200 = vld [vmem:[%s173 + $0x38] sm:$0xf]
      %v201 = vld [vmem:[%s173 + $0x3c] sm:$0xf]
      %v202 = vld [vmem:[%s1] sm:$0xf]
      %v203 = vld [vmem:[%s1 + $0x4] sm:$0xf]
      %v204 = vld [vmem:[%s1 + $0x8] sm:$0xf]
      %v205 = vld [vmem:[%s1 + $0xc] sm:$0xf]
      %v206 = vld [vmem:[%s1 + $0x10] sm:$0x7]
      %v223 = vunpack.c.l.b16 %v186
      %v224 = vunpack.c.l.b16 %v187
      %v225 = vunpack.c.l.b16 %v188
      %v226 = vunpack.c.l.b16 %v189
      %v227 = vunpack.c.l.b16 %v190
      %v228 = vunpack.c.l.b16 %v191
      %v229 = vunpack.c.l.b16 %v192
      %v230 = vunpack.c.l.b16 %v193
      %v231 = vunpack.c.l.b16 %v194
      %v232 = vunpack.c.l.b16 %v195
      %v233 = vunpack.c.l.b16 %v196
      %v234 = vunpack.c.l.b16 %v197
      %v235 = vunpack.c.l.b16 %v198
      %v236 = vunpack.c.l.b16 %v199
      %v237 = vunpack.c.l.b16 %v200
      %v238 = vunpack.c.l.b16 %v201
      %v239 = vpack.c.b16 %v224, %v223
      %v240 = vpack.c.b16 %v226, %v225
      %v241 = vpack.c.b16 %v228, %v227
      %v242 = vpack.c.b16 %v230, %v229
      %v243 = vpack.c.b16 %v232, %v231
      %v244 = vpack.c.b16 %v234, %v233
      %v245 = vpack.c.b16 %v236, %v235
      %v246 = vpack.c.b16 %v238, %v237
      %v252 = vunpack.c.l.b16 %v202
      %v253 = vunpack.c.l.b16 %v203
      %v254 = vunpack.c.l.b16 %v204
      %v255 = vunpack.c.l.b16 %v205
      %v256 = vunpack.c.l.b16 %v206
      %v257 = vpack.c.b16 %v253, %v252
      %v258 = vpack.c.b16 %v255, %v254
      %v259 = vpack.c.b16 %v256, %v256
      %vm262 = vcmask 302080
      %v264 = vsel %vm262, %v239, 0
      %v267 = vsel %vm262, %v240, 0
      %v270 = vsel %vm262, %v241, 0
      %v273 = vsel %vm262, %v242, 0
      %v276 = vsel %vm262, %v243, 0
      %v279 = vsel %vm262, %v244, 0
      %v282 = vsel %vm262, %v245, 0
      %v285 = vsel %vm262, %v246, 0
      %vm287 = vcmask 1041408
      %vm288 = vcmask 1042432
      %v289 = vsel %vm287, 4294967295, 65535
      %v290 = vsel %vm288, %v289, 0
      %v292 = vand.u32 %v259, %v290
      %294 = vmatprep.subr.bf16.mxu0 0
      %295 = vmatpush1.bf16.msra.mxu0 %v257
      %296 = vmatprep.subr.bf16.mxu0 0
      %297 = vmatpush1.bf16.msra.mxu0 %v258
      %298 = vmatprep.subr.bf16.mxu0 0
      %299 = vmatpush1.bf16.msra.mxu0 %v292
      %300 = vmatprep.subr.bf16.mxu0 0
      %301 = vmatpush1.bf16.msra.mxu0 0
      %302 = vmatprep.subr.bf16.mxu0 0
      %303 = vmatpush1.bf16.msra.mxu0 0
      %304 = vmatprep.subr.bf16.mxu0 0
      %305 = vmatpush1.bf16.msra.mxu0 0
      %306 = vmatprep.subr.bf16.mxu0 0
      %307 = vmatpush1.bf16.msra.mxu0 0
      %308 = vmatprep.subr.bf16.mxu0 0
      %309 = vmatpush1.bf16.msra.mxu0 0
      %310 = vmatprep.subr.bf16.mxu0 0
      %311 = vmatpush1.bf16.msra.mxu0 0
      %312 = vmatprep.subr.bf16.mxu0 0
      %313 = vmatpush1.bf16.msra.mxu0 0
      %314 = vmatprep.subr.bf16.mxu0 0
      %315 = vmatpush1.bf16.msra.mxu0 0
      %316 = vmatprep.subr.bf16.mxu0 0
      %317 = vmatpush1.bf16.msra.mxu0 0
      %318 = vmatprep.subr.bf16.mxu0 0
      %319 = vmatpush1.bf16.msra.mxu0 0
      %320 = vmatprep.subr.bf16.mxu0 0
      %321 = vmatpush1.bf16.msra.mxu0 0
      %322 = vmatprep.subr.bf16.mxu0 0
      %323 = vmatpush1.bf16.msra.mxu0 0
      %324 = vmatprep.subr.bf16.mxu0 0
      %325 = vmatpush1.bf16.msra.mxu0 0
      %326 = vmatprep.mubr.bf16.mxu0 0
      %327 = vmatmul.mubr.bf16.gmra.mrb[0].mxu0 %v264
      %v328 = vpop.f32.mrb[0].mxu0
      %v329 = vadd.f32 0.0, %v328
      %v330 = vpop.f32.mrb[0].mxu0
      %v331 = vpop.f32.mrb[0].mxu0
      %v332 = vadd.f32 0.0, %v331
      %v333 = vpop.f32.mrb[0].mxu0
      %334 = vmatprep.mubr.bf16.mxu0 0
      %335 = vmatmul.mubr.bf16.gmra.mrb[0].mxu0 %v267
      %v336 = vpop.f32.mrb[0].mxu0
      %v337 = vadd.f32 0.0, %v336
      %v338 = vpop.f32.mrb[0].mxu0
      %v339 = vpop.f32.mrb[0].mxu0
      %v340 = vadd.f32 0.0, %v339
      %v341 = vpop.f32.mrb[0].mxu0
      %342 = vmatprep.mubr.bf16.mxu0 0
      %343 = vmatmul.mubr.bf16.gmra.mrb[0].mxu0 %v270
      %v344 = vpop.f32.mrb[0].mxu0
      %v345 = vadd.f32 0.0, %v344
      %v346 = vpop.f32.mrb[0].mxu0
      %v347 = vpop.f32.mrb[0].mxu0
      %v348 = vadd.f32 0.0, %v347
      %v349 = vpop.f32.mrb[0].mxu0
      %350 = vmatprep.mubr.bf16.mxu0 0
      %351 = vmatmul.mubr.bf16.gmra.mrb[0].mxu0 %v273
      %v352 = vpop.f32.mrb[0].mxu0
      %v353 = vadd.f32 0.0, %v352
      %v354 = vpop.f32.mrb[0].mxu0
      %v355 = vpop.f32.mrb[0].mxu0
      %v356 = vadd.f32 0.0, %v355
      %v357 = vpop.f32.mrb[0].mxu0
      %358 = vmatprep.mubr.bf16.mxu0 0
      %359 = vmatmul.mubr.bf16.gmra.mrb[0].mxu0 %v276
      %v360 = vpop.f32.mrb[0].mxu0
      %v361 = vadd.f32 0.0, %v360
      %v362 = vpop.f32.mrb[0].mxu0
      %v363 = vpop.f32.mrb[0].mxu0
      %v364 = vadd.f32 0.0, %v363
      %v365 = vpop.f32.mrb[0].mxu0
      %366 = vmatprep.mubr.bf16.mxu0 0
      %367 = vmatmul.mubr.bf16.gmra.mrb[0].mxu0 %v279
      %v368 = vpop.f32.mrb[0].mxu0
      %v369 = vadd.f32 0.0, %v368
      %v370 = vpop.f32.mrb[0].mxu0
      %v371 = vpop.f32.mrb[0].mxu0
      %v372 = vadd.f32 0.0, %v371
      %v373 = vpop.f32.mrb[0].mxu0
      %374 = vmatprep.mubr.bf16.mxu0 0
      %375 = vmatmul.mubr.bf16.gmra.mrb[0].mxu0 %v282
      %v376 = vpop.f32.mrb[0].mxu0
      %v377 = vadd.f32 0.0, %v376
      %v378 = vpop.f32.mrb[0].mxu0
      %v379 = vpop.f32.mrb[0].mxu0
      %v380 = vadd.f32 0.0, %v379
      %v381 = vpop.f32.mrb[0].mxu0
      %382 = vmatprep.mubr.bf16.mxu0 0
      %383 = vmatmul.mubr.bf16.gmra.mrb[0].mxu0 %v285
      %v384 = vpop.f32.mrb[0].mxu0
      %v385 = vadd.f32 0.0, %v384
      %v386 = vpop.f32.mrb[0].mxu0
      %v387 = vpop.f32.mrb[0].mxu0
      %v388 = vadd.f32 0.0, %v387
      %v389 = vpop.f32.mrb[0].mxu0
      %390 = vdwg.mxu0
      %v391 = vpack.c.bf16 %v332, %v329
      %v392 = vpack.c.bf16 %v340, %v337
      %v393 = vpack.c.bf16 %v348, %v345
      %v394 = vpack.c.bf16 %v356, %v353
      %v395 = vpack.c.bf16 %v364, %v361
      %v396 = vpack.c.bf16 %v372, %v369
      %v397 = vpack.c.bf16 %v380, %v377
      %v398 = vpack.c.bf16 %v388, %v385
      %v407 = vunpack.c.l.b16 %v391
      %v408 = vunpack.c.h.b16 %v391
      %v409 = vunpack.c.l.b16 %v392
      %v410 = vunpack.c.h.b16 %v392
      %v411 = vunpack.c.l.b16 %v393
      %v412 = vunpack.c.h.b16 %v393
      %v413 = vunpack.c.l.b16 %v394
      %v414 = vunpack.c.h.b16 %v394
      %v415 = vunpack.c.l.b16 %v395
      %v416 = vunpack.c.h.b16 %v395
      %v417 = vunpack.c.l.b16 %v396
      %v418 = vunpack.c.h.b16 %v396
      %v419 = vunpack.c.l.b16 %v397
      %v420 = vunpack.c.h.b16 %v397
      %v421 = vunpack.c.l.b16 %v398
      %v422 = vunpack.c.h.b16 %v398
      %v423 = vpack.c.b16 %v407, %v407
      %v424 = vpack.c.b16 %v408, %v408
      %v425 = vpack.c.b16 %v409, %v409
      %v426 = vpack.c.b16 %v410, %v410
      %v427 = vpack.c.b16 %v411, %v411
      %v428 = vpack.c.b16 %v412, %v412
      %v429 = vpack.c.b16 %v413, %v413
      %v430 = vpack.c.b16 %v414, %v414
      %v431 = vpack.c.b16 %v415, %v415
      %v432 = vpack.c.b16 %v416, %v416
      %v433 = vpack.c.b16 %v417, %v417
      %v434 = vpack.c.b16 %v418, %v418
      %v435 = vpack.c.b16 %v419, %v419
      %v436 = vpack.c.b16 %v420, %v420
      %v437 = vpack.c.b16 %v421, %v421
      %v438 = vpack.c.b16 %v422, %v422
      %455 = vst [vmem:[%s179] sm:$0xf] %v423
      %456 = vst [vmem:[%s179 + $0x4] sm:$0xf] %v424
      %457 = vst [vmem:[%s179 + $0x8] sm:$0xf] %v425
      %458 = vst [vmem:[%s179 + $0xc] sm:$0xf] %v426
      %459 = vst [vmem:[%s179 + $0x10] sm:$0xf] %v427
      %460 = vst [vmem:[%s179 + $0x14] sm:$0xf] %v428
      %461 = vst [vmem:[%s179 + $0x18] sm:$0xf] %v429
      %462 = vst [vmem:[%s179 + $0x1c] sm:$0xf] %v430
      %463 = vst [vmem:[%s179 + $0x20] sm:$0xf] %v431
      %464 = vst [vmem:[%s179 + $0x24] sm:$0xf] %v432
      %465 = vst [vmem:[%s179 + $0x28] sm:$0xf] %v433
      %466 = vst [vmem:[%s179 + $0x2c] sm:$0xf] %v434
      %467 = vst [vmem:[%s179 + $0x30] sm:$0xf] %v435
      %468 = vst [vmem:[%s179 + $0x34] sm:$0xf] %v436
      %469 = vst [vmem:[%s179 + $0x38] sm:$0xf] %v437
      %470 = vst [vmem:[%s179 + $0x3c] sm:$0xf] %v438
      %v471 = vadd.f32 %v329, %v332
      %v472 = vadd.f32 %v471, %v337
      %v473 = vadd.f32 %v472, %v340
      %v474 = vadd.f32 %v473, %v345
      %v475 = vadd.f32 %v474, %v348
      %v476 = vadd.f32 %v475, %v353
      %v477 = vadd.f32 %v476, %v356
      %v478 = vadd.f32 %v477, %v361
      %v479 = vadd.f32 %v478, %v364
      %v480 = vadd.f32 %v479, %v369
      %v481 = vadd.f32 %v480, %v372
      %v482 = vadd.f32 %v481, %v377
      %v483 = vadd.f32 %v482, %v380
      %v484 = vadd.f32 %v483, %v385
      %v485 = vadd.f32 %v484, %v388
      %v486 = vrot.slane %v485, 4
      %v487 = vadd.f32 %v485, %v486
      %v488 = vrot.slane %v487, 2
      %v489 = vadd.f32 %v487, %v488
      %v490 = vrot.slane %v489, 1
      %v491 = vadd.f32 %v489, %v490
      %v492 = vmul.f32 %v329, %v329
      %v493 = vmul.f32 %v332, %v332
      %v494 = vmul.f32 %v337, %v337
      %v495 = vmul.f32 %v340, %v340
      %v496 = vmul.f32 %v345, %v345
      %v497 = vmul.f32 %v348, %v348
      %v498 = vmul.f32 %v353, %v353
      %v499 = vmul.f32 %v356, %v356
      %v500 = vmul.f32 %v361, %v361
      %v501 = vmul.f32 %v364, %v364
      %v502 = vmul.f32 %v369, %v369
      %v503 = vmul.f32 %v372, %v372
      %v504 = vmul.f32 %v377, %v377
      %v505 = vmul.f32 %v380, %v380
      %v506 = vmul.f32 %v385, %v385
      %v507 = vmul.f32 %v388, %v388
      %v508 = vadd.f32 %v492, %v493
      %v509 = vadd.f32 %v508, %v494
      %v510 = vadd.f32 %v509, %v495
      %v511 = vadd.f32 %v510, %v496
      %v512 = vadd.f32 %v511, %v497
      %v513 = vadd.f32 %v512, %v498
      %v514 = vadd.f32 %v513, %v499
      %v515 = vadd.f32 %v514, %v500
      %v516 = vadd.f32 %v515, %v501
      %v517 = vadd.f32 %v516, %v502
      %v518 = vadd.f32 %v517, %v503
      %v519 = vadd.f32 %v518, %v504
      %v520 = vadd.f32 %v519, %v505
      %v521 = vadd.f32 %v520, %v506
      %v522 = vadd.f32 %v521, %v507
      %v523 = vrot.slane %v522, 4
      %v524 = vadd.f32 %v522, %v523
      %v525 = vrot.slane %v524, 2
      %v526 = vadd.f32 %v524, %v525
      %v527 = vrot.slane %v526, 1
      %v528 = vadd.f32 %v526, %v527
      %vm529 = vcmask 1040384
      %v530 = vsel %vm529, %v491, %v528
      %531 = vst [vmem:[%s184] sm:$0x3] %v530
      %s532 = smul.u32 16, %s15
      %p533 = scmp.lt.s32.totalorder %s532, 63
      %s534 = scalar_select %p533, %s532, 63
      %s535 = smul.addr %s534, 4
      %s536 = scalar_lea.vmem %s2, %s535
      %p537 = scmp.lt.s32.totalorder %s15, 3
      %s538 = scalar_select %p537, %s15, 3
      %s539 = smul.addr %s538, 2
      %s540 = scalar_lea.vmem %s3, %s539
      // Predicated region
      $region29: #{conv_bn_relu.1} parent=27 // pred_check
        %p541 = pneg %p80
      $region30: #{conv_bn_relu.1} parent=27 // pred_check_branch
        %543 = sbr.rel (%p541) target = $region32
      $region31: #{conv_bn_relu.1} parent=27 // pred_region
        %s544 = smul.u32 16, %s15
      $region32: #{conv_bn_relu.1} parent=27 // pred_fallthru
        _
      // Predicated region
      $region33: #{conv_bn_relu.1} parent=27 // pred_check
        %p545 = pneg %p106
      $region34: #{conv_bn_relu.1} parent=27 // pred_check_branch
        %547 = sbr.rel (%p545) target = $region36
      $region35: #{conv_bn_relu.1} parent=27 // pred_region
        _
      $region36: #{conv_bn_relu.1} parent=27 // pred_fallthru
        _
    $region28: #{conv_bn_relu.1} parent=5 // pred_fallthru
      _
    %p548 = scmp.le.s32.totalorder 2, %s10
    // Predicated region
    $region37: #{conv_bn_relu.1} parent=5 // pred_check
      %p549 = pneg %p548
    $region38: #{conv_bn_relu.1} parent=5 // pred_check_branch
      %551 = sbr.rel (%p549) target = $region40
    $region39: #{conv_bn_relu.1} parent=5 // pred_region
      %s552 = ssub.s32 %s10, 2
      // Predicated region
      $region41: #{conv_bn_relu.1} parent=39 // pred_check
        %p553 = pneg %p86
      $region42: #{conv_bn_relu.1} parent=39 // pred_check_branch
        %555 = sbr.rel (%p553) target = $region44
      $region43: #{conv_bn_relu.1} parent=39 // pred_region
        %s556 = smul.u32 16, %s16
        %p557 = scmp.lt.s32.totalorder %s556, 63
        %s558 = scalar_select %p557, %s556, 63
        %s559 = smul.addr %s558, 4
        %s560 = scalar_lea.vmem %s2, %s559
      $region44: #{conv_bn_relu.1} parent=39 // pred_fallthru
        _
      // Predicated region
      $region45: #{conv_bn_relu.1} parent=39 // pred_check
        %p561 = pneg %p112
      $region46: #{conv_bn_relu.1} parent=39 // pred_check_branch
        %563 = sbr.rel (%p561) target = $region48
      $region47: #{conv_bn_relu.1} parent=39 // pred_region
        %p564 = scmp.lt.s32.totalorder %s16, 3
        %s565 = scalar_select %p564, %s16, 3
        %s566 = smul.addr %s565, 2
        %s567 = scalar_lea.vmem %s3, %s566
      $region48: #{conv_bn_relu.1} parent=39 // pred_fallthru
        _
    $region40: #{conv_bn_relu.1} parent=5 // pred_fallthru
      _
  $region6: #{conv_bn_relu.1} parent=0 // loop_footer
    %s14 = sadd.s32 1, %s10
  $region7: #{conv_bn_relu.1} parent=0 // loop_footer_branch
    %9 = sbr.rel target = $region3
  $region8: #{conv_bn_relu.1} parent=0 // loop_exit
    _

</llo_original>
